<compile_context>
chip_gen: v7x
topology: tpu7x:2x2x1
jax: 0.10.0
libtpu: 0.0.40
codegen_flags: <defaults>
</compile_context>

<pallas_src>
import jax
import jax.numpy as jnp
from jax.experimental import pallas as pl
from jax.experimental.pallas import tpu as pltpu


# ---------------------------------------------------------------------------
# Kernels
# ---------------------------------------------------------------------------

def _mlp_kernel_tall(x_ref, w1_ref, b1_ref, w2_ref, b2_ref, w3t_ref, b3t_ref, o_ref):
    """Narrow-output path (out_size < 128): layer 3 computed transposed so the batch
    dimension lands on lanes -> lane-dense (out, tm) store instead of masked (tm, out)."""
    # In-kernel bf16 cast of the f32 input tile (saves an extra XLA cast pass over HBM).
    xb = x_ref[...].astype(jnp.bfloat16)
    # Layer 1: bf16 MXU matmul, f32 accumulate; bias + ReLU on the VPU in f32.
    h1 = jnp.dot(xb, w1_ref[...], preferred_element_type=jnp.float32)
    h1 = jnp.maximum(h1 + b1_ref[...], 0.0)
    # Layer 2.
    h2 = jnp.dot(h1.astype(jnp.bfloat16), w2_ref[...], preferred_element_type=jnp.float32)
    h2 = jnp.maximum(h2 + b2_ref[...], 0.0)
    # Layer 3, transposed: (out, hidden) x (tm, hidden) contracted on hidden -> (out, tm).
    logits_t = jax.lax.dot_general(
        w3t_ref[...], h2.astype(jnp.bfloat16),
        dimension_numbers=(((1,), (1,)), ((), ())),
        preferred_element_type=jnp.float32,
    )
    logits_t = logits_t + b3t_ref[...]
    # Sigmoid: EUP exp + EUP approx reciprocal (EUP slot otherwise idle; ~2e-4 abs error).
    o_ref[...] = pl.reciprocal(1.0 + jnp.exp(-logits_t), approx=True)


def _mlp_kernel_wide(x_ref, w1_ref, b1_ref, w2_ref, b2_ref, w3_ref, b3_ref, o_ref):
    """Wide-output path (out_size >= 128): output is already lane-dense in the natural
    (tm, out) orientation, so no transpose trick and no wrapper transpose."""
    xb = x_ref[...].astype(jnp.bfloat16)
    h1 = jnp.dot(xb, w1_ref[...], preferred_element_type=jnp.float32)
    h1 = jnp.maximum(h1 + b1_ref[...], 0.0)
    h2 = jnp.dot(h1.astype(jnp.bfloat16), w2_ref[...], preferred_element_type=jnp.float32)
    h2 = jnp.maximum(h2 + b2_ref[...], 0.0)
    logits = jnp.dot(h2.astype(jnp.bfloat16), w3_ref[...], preferred_element_type=jnp.float32)
    logits = logits + b3_ref[...]
    o_ref[...] = pl.reciprocal(1.0 + jnp.exp(-logits), approx=True)


# ---------------------------------------------------------------------------
# Wrapper
# ---------------------------------------------------------------------------

def prepare_params(w1, b1, w2, b2, w3, b3):
    """One-time weight preparation (cast/transpose hoisted out of the per-call wrapper).

    Weights stored as (in, out) — PyTorch stores (out, in) and computes x @ W.T, so a
    PyTorch state_dict would be transposed once here.
    """
    b1 = jnp.asarray(b1, jnp.float32).reshape(1, -1)
    b2 = jnp.asarray(b2, jnp.float32).reshape(1, -1)
    b3 = jnp.asarray(b3, jnp.float32).reshape(1, -1)
    return {
        "w1": jnp.asarray(w1, jnp.bfloat16),            # (in, hidden)
        "b1": b1,                                        # (1, hidden) f32
        "w2": jnp.asarray(w2, jnp.bfloat16),            # (hidden, hidden)
        "b2": b2,                                        # (1, hidden) f32
        "w3": jnp.asarray(w3, jnp.bfloat16),            # (hidden, out)   — wide path
        "b3": b3,                                        # (1, out) f32    — wide path
        "w3t": jnp.transpose(jnp.asarray(w3, jnp.bfloat16)),  # (out, hidden) — tall path
        "b3t": jnp.transpose(b3),                        # (out, 1) f32    — tall path
    }


def _pick_tile(batch, tm):
    """Batch-tile selection.

    - Small batch (< 256): one tile with block dims equal to the full array dims
      (always layout-legal, no pipeline overhead).
    - Otherwise: 128-aligned tiles, capped at `tm`, and always >= 2 tiles so the
      'parallel' batch axis can shard across both TensorCores on v7x.
    """
    if batch < 256:
        return batch, 1
    half = -(-batch // 2)                       # ceil(B/2)
    half_aligned = -(-half // 128) * 128        # 128-aligned -> lane-dense ragged handling
    tm_eff = max(128, min(tm, half_aligned))
    return tm_eff, pl.cdiv(batch, tm_eff)


def mlp_forward_prepared(x, params, *, tm=1024):
    """x: (B, in) f32, params from prepare_params(). Returns (B, out) f32."""
    x = jnp.asarray(x, jnp.float32)
    B, in_size = x.shape
    hidden = params["w1"].shape[1]
    out_size = params["w3"].shape[1]

    tm_eff, num_tiles = _pick_tile(B, tm)

    def full_spec(arr):
        return pl.BlockSpec(arr.shape, lambda i: (0,) * arr.ndim)

    flops = 2 * B * (in_size * hidden + hidden * hidden + hidden * out_size)
    bytes_accessed = (
        x.size * 4                                            # f32 input (no wrapper cast/pad)
        + (params["w1"].size + params["w2"].size + params["w3"].size) * 2   # bf16 weights
        + (params["b1"].size + params["b2"].size + params["b3"].size) * 4   # f32 biases
        + B * out_size * 4                                    # f32 output
    )
    cost = pl.CostEstimate(flops=flops, transcendentals=B * out_size,
                           bytes_accessed=bytes_accessed)
    cparams = pltpu.CompilerParams(dimension_semantics=("parallel",))
    x_spec = pl.BlockSpec((tm_eff, in_size), lambda i: (i, 0))

    if out_size < 128:
        # Transposed layer-3 / (out, B) output: batch on lanes -> unmasked stores.
        out_t = pl.pallas_call(
            _mlp_kernel_tall,
            out_shape=jax.ShapeDtypeStruct((out_size, B), jnp.float32),
            grid=(num_tiles,),
            in_specs=[
                x_spec,
                full_spec(params["w1"]), full_spec(params["b1"]),
                full_spec(params["w2"]), full_spec(params["b2"]),
                full_spec(params["w3t"]), full_spec(params["b3t"]),
            ],
            out_specs=pl.BlockSpec((out_size, tm_eff), lambda i: (0, i)),
            compiler_params=cparams,
            cost_estimate=cost,
        )(x, params["w1"], params["b1"], params["w2"], params["b2"],
          params["w3t"], params["b3t"])
        return jnp.transpose(out_t)                           # (1, B)->(B, 1): ~free reshape
    else:
        # Wide output: natural orientation is already lane-dense; no wrapper transpose.
        return pl.pallas_call(
            _mlp_kernel_wide,
            out_shape=jax.ShapeDtypeStruct((B, out_size), jnp.float32),
            grid=(num_tiles,),
            in_specs=[
                x_spec,
                full_spec(params["w1"]), full_spec(params["b1"]),
                full_spec(params["w2"]), full_spec(params["b2"]),
                full_spec(params["w3"]), full_spec(params["b3"]),
            ],
            out_specs=pl.BlockSpec((tm_eff, out_size), lambda i: (i, 0)),
            compiler_params=cparams,
            cost_estimate=cost,
        )(x, params["w1"], params["b1"], params["w2"], params["b2"],
          params["w3"], params["b3"])


def mlp_forward(x, w1, b1, w2, b2, w3, b3, *, tm=1024):
    """Convenience wrapper (prefer prepare_params() once + mlp_forward_prepared per step)."""
    return mlp_forward_prepared(x, prepare_params(w1, b1, w2, b2, w3, b3), tm=tm)


# ---------------------------------------------------------------------------
# Reference / init helpers
# ---------------------------------------------------------------------------

def init_linear(key, in_features, out_features):
    """Deterministic init mimicking nn.Linear's uniform(-1/sqrt(in), 1/sqrt(in))."""
    kw, kb = jax.random.split(key)
    bound = 1.0 / jnp.sqrt(float(in_features))
    w = jax.random.uniform(kw, (in_features, out_features), jnp.float32, -bound, bound)
    b = jax.random.uniform(kb, (1, out_features), jnp.float32, -bound, bound)
    return w, b


def ref_forward_f32(x, w1, b1, w2, b2, w3, b3):
    h = jnp.maximum(x @ w1 + b1, 0.0)
    h = jnp.maximum(h @ w2 + b2, 0.0)
    return jax.nn.sigmoid(h @ w3 + b3)


def ref_forward_bf16(x, w1, b1, w2, b2, w3, b3):
    bf = jnp.bfloat16
    h = jnp.dot(x.astype(bf), w1.astype(bf), preferred_element_type=jnp.float32) + b1
    h = jnp.maximum(h, 0.0)
    h = jnp.dot(h.astype(bf), w2.astype(bf), preferred_element_type=jnp.float32) + b2
    h = jnp.maximum(h, 0.0)
    logits = jnp.dot(h.astype(bf), w3.astype(bf), preferred_element_type=jnp.float32) + b3
    return jax.nn.sigmoid(logits)


# ---------------------------------------------------------------------------
# Main
# ---------------------------------------------------------------------------

if __name__ == "__main__":
    batch = 8
    input_size = 16
    hidden_size = 32
    output_size = 1

    key = jax.random.PRNGKey(0)
    kx, k1, k2, k3 = jax.random.split(key, 4)

    x = jax.random.normal(kx, (batch, input_size), jnp.float32)
    w1, b1 = init_linear(k1, input_size, hidden_size)
    w2, b2 = init_linear(k2, hidden_size, hidden_size)
    w3, b3 = init_linear(k3, hidden_size, output_size)

    # Weights are prepared ONCE and reused across forward calls.
    params = prepare_params(w1, b1, w2, b2, w3, b3)

    # Small batch: single grid step, everything resident, f32 x straight into the kernel.
    out = jax.block_until_ready(mlp_forward_prepared(x, params))
    assert out.shape == (batch, output_size)
    assert jnp.allclose(out, ref_forward_bf16(x, w1, b1, w2, b2, w3, b3), atol=2e-3), \
        "mismatch vs bf16-matched reference"
    assert jnp.allclose(out, ref_forward_f32(x, w1, b1, w2, b2, w3, b3), atol=3e-2), \
        "mismatch vs f32 reference"

    # Multi-tile ragged path: B=300 -> >=2 lane-aligned tiles, last one partial, NO jnp.pad.
    x2 = jax.random.normal(jax.random.PRNGKey(1), (300, input_size), jnp.float32)
    out2 = jax.block_until_ready(mlp_forward_prepared(x2, params))
    assert out2.shape == (300, output_size)
    assert jnp.allclose(out2, ref_forward_bf16(x2, w1, b1, w2, b2, w3, b3), atol=2e-3), \
        "mismatch vs bf16-matched reference (tiled ragged path)"

    # Wide-output path (out_size >= 128): direct orientation, no transpose trick.
    w3w, b3w = init_linear(jax.random.PRNGKey(2), hidden_size, 128)
    params_w = prepare_params(w1, b1, w2, b2, w3w, b3w)
    out3 = jax.block_until_ready(mlp_forward_prepared(x2, params_w))
    assert out3.shape == (300, 128)
    assert jnp.allclose(out3, ref_forward_bf16(x2, w1, b1, w2, b2, w3w, b3w), atol=2e-3), \
        "mismatch vs bf16-matched reference (wide-output path)"

    print("KERNEL_OK")
</pallas_src>

<mosaic_0001>
module attributes {stable_mosaic.version = 11 : i64} {
  func.func @_mlp_kernel_tall(%arg0: i32, %arg1: memref<8x16xf32, #tpu.memory_space<vmem>>, %arg2: memref<16x32xbf16, #tpu.memory_space<vmem>>, %arg3: memref<1x32xf32, #tpu.memory_space<vmem>>, %arg4: memref<32x32xbf16, #tpu.memory_space<vmem>>, %arg5: memref<1x32xf32, #tpu.memory_space<vmem>>, %arg6: memref<1x32xbf16, #tpu.memory_space<vmem>>, %arg7: memref<1x1xf32, #tpu.memory_space<vmem>>, %arg8: memref<1x8xf32, #tpu.memory_space<vmem>>) attributes {dimension_semantics = [#tpu.dimension_semantics<parallel>], iteration_bounds = array<i64: 1>, scalar_prefetch = 0 : i64, scratch_operands = 0 : i64, tpu.core_type = #tpu.core_type<tc>, window_params = [{transform_indices = @transform_0, window_bounds = array<i64: 8, 16>}, {pipeline_mode = #tpu.pipeline_mode<synchronous>, transform_indices = @transform_1, window_bounds = array<i64: 16, 32>}, {pipeline_mode = #tpu.pipeline_mode<synchronous>, transform_indices = @transform_2, window_bounds = array<i64: 1, 32>}, {pipeline_mode = #tpu.pipeline_mode<synchronous>, transform_indices = @transform_3, window_bounds = array<i64: 32, 32>}, {pipeline_mode = #tpu.pipeline_mode<synchronous>, transform_indices = @transform_4, window_bounds = array<i64: 1, 32>}, {pipeline_mode = #tpu.pipeline_mode<synchronous>, transform_indices = @transform_5, window_bounds = array<i64: 1, 32>}, {pipeline_mode = #tpu.pipeline_mode<synchronous>, transform_indices = @transform_6, window_bounds = array<i64: 1, 1>}, {transform_indices = @transform_7, window_bounds = array<i64: 1, 8>}]} {
    %c0 = arith.constant 0 : index
    %c0_0 = arith.constant 0 : index
    %0 = vector.load %arg1[%c0, %c0_0] : memref<8x16xf32, #tpu.memory_space<vmem>>, vector<8x16xf32>
    %1 = arith.truncf %0 : vector<8x16xf32> to vector<8x16xbf16>
    %c0_1 = arith.constant 0 : index
    %c0_2 = arith.constant 0 : index
    %2 = vector.load %arg2[%c0_1, %c0_2] : memref<16x32xbf16, #tpu.memory_space<vmem>>, vector<16x32xbf16>
    %cst = arith.constant dense<0.000000e+00> : vector<8x32xf32>
    %3 = tpu.matmul %1, %2, %cst {dimension_numbers = #tpu.dot_dimension_numbers<[1], [0], [0], [1], [0, 0, 1, 1], [], []>} : vector<8x16xbf16>, vector<16x32xbf16>, vector<8x32xf32> -> vector<8x32xf32>
    %c0_3 = arith.constant 0 : index
    %c0_4 = arith.constant 0 : index
    %4 = vector.load %arg3[%c0_3, %c0_4] : memref<1x32xf32, #tpu.memory_space<vmem>>, vector<1x32xf32>
    %5 = vector.broadcast %4 : vector<1x32xf32> to vector<8x32xf32>
    %6 = arith.addf %3, %5 : vector<8x32xf32>
    %cst_5 = arith.constant 0.000000e+00 : f32
    %7 = vector.broadcast %cst_5 : f32 to vector<8x32xf32>
    %8 = arith.maximumf %6, %7 : vector<8x32xf32>
    %9 = arith.truncf %8 : vector<8x32xf32> to vector<8x32xbf16>
    %c0_6 = arith.constant 0 : index
    %c0_7 = arith.constant 0 : index
    %10 = vector.load %arg4[%c0_6, %c0_7] : memref<32x32xbf16, #tpu.memory_space<vmem>>, vector<32x32xbf16>
    %cst_8 = arith.constant dense<0.000000e+00> : vector<8x32xf32>
    %11 = tpu.matmul %9, %10, %cst_8 {dimension_numbers = #tpu.dot_dimension_numbers<[1], [0], [0], [1], [0, 0, 1, 1], [], []>} : vector<8x32xbf16>, vector<32x32xbf16>, vector<8x32xf32> -> vector<8x32xf32>
    %c0_9 = arith.constant 0 : index
    %c0_10 = arith.constant 0 : index
    %12 = vector.load %arg5[%c0_9, %c0_10] : memref<1x32xf32, #tpu.memory_space<vmem>>, vector<1x32xf32>
    %13 = vector.broadcast %12 : vector<1x32xf32> to vector<8x32xf32>
    %14 = arith.addf %11, %13 : vector<8x32xf32>
    %cst_11 = arith.constant 0.000000e+00 : f32
    %15 = vector.broadcast %cst_11 : f32 to vector<8x32xf32>
    %16 = arith.maximumf %14, %15 : vector<8x32xf32>
    %c0_12 = arith.constant 0 : index
    %c0_13 = arith.constant 0 : index
    %17 = vector.load %arg6[%c0_12, %c0_13] : memref<1x32xbf16, #tpu.memory_space<vmem>>, vector<1x32xbf16>
    %18 = arith.truncf %16 : vector<8x32xf32> to vector<8x32xbf16>
    %cst_14 = arith.constant dense<0.000000e+00> : vector<1x8xf32>
    %19 = tpu.matmul %17, %18, %cst_14 {dimension_numbers = #tpu.dot_dimension_numbers<[1], [1], [0], [0], [0, 0, 1, 0], [], []>} : vector<1x32xbf16>, vector<8x32xbf16>, vector<1x8xf32> -> vector<1x8xf32>
    %c0_15 = arith.constant 0 : index
    %c0_16 = arith.constant 0 : index
    %20 = vector.load %arg7[%c0_15, %c0_16] : memref<1x1xf32, #tpu.memory_space<vmem>>, vector<1x1xf32>
    %21 = vector.broadcast %20 : vector<1x1xf32> to vector<1x8xf32>
    %22 = arith.addf %19, %21 : vector<1x8xf32>
    %cst_17 = arith.constant 0.000000e+00 : f32
    %23 = vector.broadcast %cst_17 : f32 to vector<1x8xf32>
    %24 = arith.subf %23, %22 : vector<1x8xf32>
    %25 = math.exp %24 : vector<1x8xf32>
    %cst_18 = arith.constant 1.000000e+00 : f32
    %26 = vector.broadcast %cst_18 : f32 to vector<1x8xf32>
    %27 = arith.addf %26, %25 : vector<1x8xf32>
    %28 = tpu.reciprocal %27 {approx = true} : vector<1x8xf32> -> vector<1x8xf32>
    %c0_19 = arith.constant 0 : index
    %c0_20 = arith.constant 0 : index
    %29 = vector.load %arg8[%c0_19, %c0_20] : memref<1x8xf32, #tpu.memory_space<vmem>>, vector<1x8xf32>
    tpu.vector_store %arg8[%c0_19, %c0_20], %28 {strides = array<i32>} : memref<1x8xf32, #tpu.memory_space<vmem>>, vector<1x8xf32>,
    return
  }
  func.func @transform_0(%arg0: i32) -> (i32, i32) {
    %c0_i32 = arith.constant 0 : i32
    %c0_i32_0 = arith.constant 0 : i32
    return %arg0, %c0_i32 : i32, i32
  }
  func.func @transform_1(%arg0: i32) -> (i32, i32) {
    %c0_i32 = arith.constant 0 : i32
    %c0_i32_0 = arith.constant 0 : i32
    %c0_i32_1 = arith.constant 0 : i32
    return %c0_i32, %c0_i32_0 : i32, i32
  }
  func.func @transform_2(%arg0: i32) -> (i32, i32) {
    %c0_i32 = arith.constant 0 : i32
    %c0_i32_0 = arith.constant 0 : i32
    %c0_i32_1 = arith.constant 0 : i32
    return %c0_i32, %c0_i32_0 : i32, i32
  }
  func.func @transform_3(%arg0: i32) -> (i32, i32) {
    %c0_i32 = arith.constant 0 : i32
    %c0_i32_0 = arith.constant 0 : i32
    %c0_i32_1 = arith.constant 0 : i32
    return %c0_i32, %c0_i32_0 : i32, i32
  }
  func.func @transform_4(%arg0: i32) -> (i32, i32) {
    %c0_i32 = arith.constant 0 : i32
    %c0_i32_0 = arith.constant 0 : i32
    %c0_i32_1 = arith.constant 0 : i32
    return %c0_i32, %c0_i32_0 : i32, i32
  }
  func.func @transform_5(%arg0: i32) -> (i32, i32) {
    %c0_i32 = arith.constant 0 : i32
    %c0_i32_0 = arith.constant 0 : i32
    %c0_i32_1 = arith.constant 0 : i32
    return %c0_i32, %c0_i32_0 : i32, i32
  }
  func.func @transform_6(%arg0: i32) -> (i32, i32) {
    %c0_i32 = arith.constant 0 : i32
    %c0_i32_0 = arith.constant 0 : i32
    %c0_i32_1 = arith.constant 0 : i32
    return %c0_i32, %c0_i32_0 : i32, i32
  }
  func.func @transform_7(%arg0: i32) -> (i32, i32) {
    %c0_i32 = arith.constant 0 : i32
    %c0_i32_0 = arith.constant 0 : i32
    return %c0_i32, %arg0 : i32, i32
  }
}

</mosaic_0001>

<llo_original>
// kernel: tpu_custom_call.1
$region0: #{tpu_custom_call.1}
  #allocation0 [shape = 'u32[]', space=smem, size = 0x4, offset = 0x4, fixed_abs, tag = 'smem constant byte address 0x4 - core index']
  #allocation1 [shape = 'u32[144,128]{1,0:T(1,128)}', space=vmem, size = 0x12000, scoped, tag = 'internal scratch']
  #allocation2 [shape = 'f32[1,1]{1,0:T(1,128)S(1)}', space=vmem, size = 0x200, scoped, tag = 'scoped memory for tpu_custom_call.1']
  %s0 = inlined_call_operand.hbm [shape: f32[8,16], index: 0, kind: input, shape index: {}]
  %s1 = inlined_call_operand.hbm [shape: bf16[16,32], index: 1, kind: input, shape index: {}]
  %s2 = inlined_call_operand.vmem [shape: f32[1,32], index: 2, kind: input, shape index: {}]
  %s3 = inlined_call_operand.hbm [shape: bf16[32,32], index: 3, kind: input, shape index: {}]
  %s4 = inlined_call_operand.vmem [shape: f32[1,32], index: 4, kind: input, shape index: {}]
  %s5 = inlined_call_operand.vmem [shape: bf16[1,32], index: 5, kind: input, shape index: {}]
  %s6 = inlined_call_operand.<no memory space> [shape: f32[1,1], index: 6, kind: input, shape index: {}]
  %s7 = inlined_call_operand.hbm [shape: f32[1,8], index: 7, kind: output, shape index: {}]
  %s8 = sld [smem:[#allocation0]]
  $region50: #{tpu_custom_call.1} parent=0
    _
  %s10 = ssub.s32 1, %s8
  %s11 = scalar_select 0, %s10, %s8
  %v12 = vstv %s6
  %13 = vst [vmem:[#allocation2] sm:$0x1] %v12
  $region1: #{tpu_custom_call.1} parent=0
    #allocation3 [shape = 'u8[4096]{0}', space=vmem, size = 0x1000, scoped, tag = 'input window, operand 0, single buffered']
    #allocation4 [shape = 's32[1]{0}', space=sflag, size = 0x4, scoped, tag = 'scoped memory for tpu_custom_call.1']
    #allocation5 [shape = 's32[1]{0}', space=sflag, size = 0x4, scoped, tag = 'scoped memory for tpu_custom_call.1']
    #allocation6 [shape = 'u8[4096]{0}', space=vmem, size = 0x1000, scoped, tag = 'input window, operand 1, single buffered']
    #allocation7 [shape = 's32[1]{0}', space=sflag, size = 0x4, scoped, tag = 'scoped memory for tpu_custom_call.1']
    #allocation8 [shape = 'u8[8192]{0}', space=vmem, size = 0x2000, scoped, tag = 'input window, operand 3, single buffered']
    #allocation9 [shape = 'u8[512]{0}', space=vmem, size = 0x400, scoped, tag = 'output window, operand 0, single buffered']
    %14 = vsyncpa [#allocation4], 0
    %15 = vsyncpa [#allocation7], 0
    %16 = vsyncpa [#allocation5], 0
    // Predicated region
    $region2: #{tpu_custom_call.1} parent=1 // pred_check
      _
    $region3: #{tpu_custom_call.1} parent=1 // pred_check_branch
      %18 = sbr.rel (0) target = $region5
    $region4: #{tpu_custom_call.1} parent=1 // pred_region
      %s20 = ssub.s32 128, 128
      %21 = vsyncadd [#allocation4], %s20
      %s23 = sshll.u32 [#allocation3], 4
      %s24 = int_to_ptr.vmem [resolvable:$true] %s23
      %26 = dma.hbm_to_vmem [thread:$0]  %s0, 128, %s24, [#allocation4]
    $region5: #{tpu_custom_call.1} parent=1 // pred_fallthru
      _
    // Predicated region
    $region6: #{tpu_custom_call.1} parent=1 // pred_check
      _
    $region7: #{tpu_custom_call.1} parent=1 // pred_check_branch
      %28 = sbr.rel (0) target = $region9
    $region8: #{tpu_custom_call.1} parent=1 // pred_region
      %s30 = ssub.s32 128, 128
      %31 = vsyncadd [#allocation7], %s30
      %s32 = sshll.u32 [#allocation6], 4
      %s33 = int_to_ptr.vmem [resolvable:$true] %s32
      %38 = dma.hbm_to_vmem [thread:$0]  %s1, 128, %s33, [#allocation7], 64, 64, 4
    $region9: #{tpu_custom_call.1} parent=1 // pred_fallthru
      _
    // Predicated region
    $region10: #{tpu_custom_call.1} parent=1 // pred_check
      _
    $region11: #{tpu_custom_call.1} parent=1 // pred_check_branch
      %40 = sbr.rel (0) target = $region13
    $region12: #{tpu_custom_call.1} parent=1 // pred_region
      _
    $region13: #{tpu_custom_call.1} parent=1 // pred_fallthru
      _
    // Predicated region
    $region14: #{tpu_custom_call.1} parent=1 // pred_check
      _
    $region15: #{tpu_custom_call.1} parent=1 // pred_check_branch
      %42 = sbr.rel (0) target = $region17
    $region16: #{tpu_custom_call.1} parent=1 // pred_region
      %s44 = ssub.s32 256, 256
      %45 = vsyncadd [#allocation7], %s44
      %s46 = sshll.u32 [#allocation8], 4
      %s47 = int_to_ptr.vmem [resolvable:$true] %s46
      %52 = dma.hbm_to_vmem [thread:$0]  %s3, 256, %s47, [#allocation7], 64, 64, 4
    $region17: #{tpu_custom_call.1} parent=1 // pred_fallthru
      _
    // Predicated region
    $region18: #{tpu_custom_call.1} parent=1 // pred_check
      _
    $region19: #{tpu_custom_call.1} parent=1 // pred_check_branch
      %54 = sbr.rel (0) target = $region21
    $region20: #{tpu_custom_call.1} parent=1 // pred_region
      _
    $region21: #{tpu_custom_call.1} parent=1 // pred_fallthru
      _
    // Predicated region
    $region22: #{tpu_custom_call.1} parent=1 // pred_check
      _
    $region23: #{tpu_custom_call.1} parent=1 // pred_check_branch
      %56 = sbr.rel (0) target = $region25
    $region24: #{tpu_custom_call.1} parent=1 // pred_region
      _
    $region25: #{tpu_custom_call.1} parent=1 // pred_fallthru
      _
    // Predicated region
    $region26: #{tpu_custom_call.1} parent=1 // pred_check
      _
    $region27: #{tpu_custom_call.1} parent=1 // pred_check_branch
      %58 = sbr.rel (0) target = $region29
    $region28: #{tpu_custom_call.1} parent=1 // pred_region
      _
    $region29: #{tpu_custom_call.1} parent=1 // pred_fallthru
      _
    // Predicated region
    $region30: #{tpu_custom_call.1} parent=1 // pred_check
      _
    $region31: #{tpu_custom_call.1} parent=1 // pred_check_branch
      %60 = sbr.rel (0) target = $region33
    $region32: #{tpu_custom_call.1} parent=1 // pred_region
      %61 = dma.done [#allocation4], 128
    $region33: #{tpu_custom_call.1} parent=1 // pred_fallthru
      _
    // Predicated region
    $region34: #{tpu_custom_call.1} parent=1 // pred_check
      _
    $region35: #{tpu_custom_call.1} parent=1 // pred_check_branch
      %63 = sbr.rel (0) target = $region37
    $region36: #{tpu_custom_call.1} parent=1 // pred_region
      %64 = dma.done [#allocation7], 128
    $region37: #{tpu_custom_call.1} parent=1 // pred_fallthru
      _
    // Predicated region
    $region38: #{tpu_custom_call.1} parent=1 // pred_check
      _
    $region39: #{tpu_custom_call.1} parent=1 // pred_check_branch
      %66 = sbr.rel (0) target = $region41
    $region40: #{tpu_custom_call.1} parent=1 // pred_region
      %67 = dma.done [#allocation7], 256
    $region41: #{tpu_custom_call.1} parent=1 // pred_fallthru
      _
    %v69 = vld [vmem:[#allocation3] sm:$0xff]
    %v70 = vpack.c.bf16 %v69, %v69
    %v71 = vld [vmem:[#allocation6] sm:$0xf]
    %v72 = vld [vmem:[#allocation6 + $0x4] sm:$0xf]
    %v73 = vld [vmem:[%s2] sm:$0x1]
    %v75 = vlaneseq
    %v76 = vshrl.u32 %v75, 7
    %v77 = vsub.s32 0, %v76
    %v78 = vrot.slane %v73, %v77
    %v82 = vunpack.c.l.b16 %v71
    %v83 = vunpack.c.l.b16 %v72
    %v84 = vpack.c.b16 %v83, %v82
    %vm86 = vcmask 130048
    %v88 = vsel %vm86, %v70, 0
    %90 = vmatprep.subr.bf16.mxu0 0
    %91 = vmatpush1.bf16.msra.mxu0 %v84
    %92 = vmatprep.subr.bf16.mxu0 0
    %93 = vmatpush1.bf16.msra.mxu0 0
    %94 = vmatprep.subr.bf16.mxu0 0
    %95 = vmatpush1.bf16.msra.mxu0 0
    %96 = vmatprep.subr.bf16.mxu0 0
    %97 = vmatpush1.bf16.msra.mxu0 0
    %98 = vmatprep.subr.bf16.mxu0 0
    %99 = vmatpush1.bf16.msra.mxu0 0
    %100 = vmatprep.subr.bf16.mxu0 0
    %101 = vmatpush1.bf16.msra.mxu0 0
    %102 = vmatprep.subr.bf16.mxu0 0
    %103 = vmatpush1.bf16.msra.mxu0 0
    %104 = vmatprep.subr.bf16.mxu0 0
    %105 = vmatpush1.bf16.msra.mxu0 0
    %106 = vmatprep.subr.bf16.mxu0 0
    %107 = vmatpush1.bf16.msra.mxu0 0
    %108 = vmatprep.subr.bf16.mxu0 0
    %109 = vmatpush1.bf16.msra.mxu0 0
    %110 = vmatprep.subr.bf16.mxu0 0
    %111 = vmatpush1.bf16.msra.mxu0 0
    %112 = vmatprep.subr.bf16.mxu0 0
    %113 = vmatpush1.bf16.msra.mxu0 0
    %114 = vmatprep.subr.bf16.mxu0 0
    %115 = vmatpush1.bf16.msra.mxu0 0
    %116 = vmatprep.subr.bf16.mxu0 0
    %117 = vmatpush1.bf16.msra.mxu0 0
    %118 = vmatprep.subr.bf16.mxu0 0
    %119 = vmatpush1.bf16.msra.mxu0 0
    %120 = vmatprep.subr.bf16.mxu0 0
    %121 = vmatpush1.bf16.msra.mxu0 0
    %122 = vmatprep.mubr.bf16.mxu0 0
    %123 = vmatmul.mubr.bf16.gmra.mrb[0].mxu0 %v88
    %v124 = vpop.f32.mrb[0].mxu0
    %v125 = vadd.f32 %v78, %v124
    %v126 = vpop.f32.mrb[0].mxu0
    %v127 = vpop.f32.mrb[0].mxu0
    %v128 = vpop.f32.mrb[0].mxu0
    %129 = vdwg.mxu0
    %v130 = vmax.f32 %v125, 0.0
    %v131 = vpack.c.bf16 %v130, %v130
    %v132 = vld [vmem:[#allocation8] sm:$0xf]
    %v133 = vld [vmem:[#allocation8 + $0x4] sm:$0xf]
    %v134 = vld [vmem:[#allocation8 + $0x8] sm:$0xf]
    %v135 = vld [vmem:[#allocation8 + $0xc] sm:$0xf]
    %v136 = vld [vmem:[%s4] sm:$0x1]
    %v138 = vlaneseq
    %v139 = vshrl.u32 %v138, 7
    %v140 = vsub.s32 0, %v139
    %v141 = vrot.slane %v136, %v140
    %v147 = vunpack.c.l.b16 %v132
    %v148 = vunpack.c.l.b16 %v133
    %v149 = vunpack.c.l.b16 %v134
    %v150 = vunpack.c.l.b16 %v135
    %v151 = vpack.c.b16 %v148, %v147
    %v152 = vpack.c.b16 %v150, %v149
    %vm155 = vcmask 261120
    %v157 = vsel %vm155, %v131, 0
    %159 = vmatprep.subr.bf16.mxu0 0
    %160 = vmatpush1.bf16.msra.mxu0 %v151
    %161 = vmatprep.subr.bf16.mxu0 0
    %162 = vmatpush1.bf16.msra.mxu0 %v152
    %163 = vmatprep.subr.bf16.mxu0 0
    %164 = vmatpush1.bf16.msra.mxu0 0
    %165 = vmatprep.subr.bf16.mxu0 0
    %166 = vmatpush1.bf16.msra.mxu0 0
    %167 = vmatprep.subr.bf16.mxu0 0
    %168 = vmatpush1.bf16.msra.mxu0 0
    %169 = vmatprep.subr.bf16.mxu0 0
    %170 = vmatpush1.bf16.msra.mxu0 0
    %171 = vmatprep.subr.bf16.mxu0 0
    %172 = vmatpush1.bf16.msra.mxu0 0
    %173 = vmatprep.subr.bf16.mxu0 0
    %174 = vmatpush1.bf16.msra.mxu0 0
    %175 = vmatprep.subr.bf16.mxu0 0
    %176 = vmatpush1.bf16.msra.mxu0 0
    %177 = vmatprep.subr.bf16.mxu0 0
    %178 = vmatpush1.bf16.msra.mxu0 0
    %179 = vmatprep.subr.bf16.mxu0 0
    %180 = vmatpush1.bf16.msra.mxu0 0
    %181 = vmatprep.subr.bf16.mxu0 0
    %182 = vmatpush1.bf16.msra.mxu0 0
    %183 = vmatprep.subr.bf16.mxu0 0
    %184 = vmatpush1.bf16.msra.mxu0 0
    %185 = vmatprep.subr.bf16.mxu0 0
    %186 = vmatpush1.bf16.msra.mxu0 0
    %187 = vmatprep.subr.bf16.mxu0 0
    %188 = vmatpush1.bf16.msra.mxu0 0
    %189 = vmatprep.subr.bf16.mxu0 0
    %190 = vmatpush1.bf16.msra.mxu0 0
    %191 = vmatprep.mubr.bf16.mxu0 0
    %192 = vmatmul.mubr.bf16.gmra.mrb[0].mxu0 %v157
    %v193 = vpop.f32.mrb[0].mxu0
    %v194 = vadd.f32 %v141, %v193
    %v195 = vpop.f32.mrb[0].mxu0
    %v196 = vpop.f32.mrb[0].mxu0
    %v197 = vpop.f32.mrb[0].mxu0
    %198 = vdwg.mxu0
    %v199 = vmax.f32 %v194, 0.0
    %v200 = vld [vmem:[%s5] sm:$0x1]
    %v201 = vpack.c.bf16 %v199, %v199
    %v202 = vld [vmem:[#allocation2] sm:$0x1]
    %204 = vset.pattern.permute.xlu0 0
    %205 = vperm.xlu0 %204, %v202
    %v206 = vpop.permute.xlu0 %205
    %v208 = vlaneseq
    %v209 = vshrl.u32 %v208, 7
    %v210 = vsub.s32 0, %v209
    %v211 = vrot.slane %v206, %v210
    %v213 = vsel %vm155, %v200, 0
    %v216 = vsel %vm155, %v201, 0
    %218 = vmatprep.subr.bf16.mxu0 0
    %219 = vmatpush1.bf16.xpose.msra.mxu0 %v216
    %220 = vmatprep.subr.bf16.mxu0 0
    %221 = vmatpush1.bf16.xpose.msra.mxu0 0
    %222 = vmatprep.subr.bf16.mxu0 0
    %223 = vmatpush1.bf16.xpose.msra.mxu0 0
    %224 = vmatprep.subr.bf16.mxu0 0
    %225 = vmatpush1.bf16.xpose.msra.mxu0 0
    %226 = vmatprep.subr.bf16.mxu0 0
    %227 = vmatpush1.bf16.xpose.msra.mxu0 0
    %228 = vmatprep.subr.bf16.mxu0 0
    %229 = vmatpush1.bf16.xpose.msra.mxu0 0
    %230 = vmatprep.subr.bf16.mxu0 0
    %231 = vmatpush1.bf16.xpose.msra.mxu0 0
    %232 = vmatprep.subr.bf16.mxu0 0
    %233 = vmatpush1.bf16.xpose.msra.mxu0 0
    %234 = vmatprep.subr.bf16.mxu0 0
    %235 = vmatpush1.bf16.xpose.msra.mxu0 0
    %236 = vmatprep.subr.bf16.mxu0 0
    %237 = vmatpush1.bf16.xpose.msra.mxu0 0
    %238 = vmatprep.subr.bf16.mxu0 0
    %239 = vmatpush1.bf16.xpose.msra.mxu0 0
    %240 = vmatprep.subr.bf16.mxu0 0
    %241 = vmatpush1.bf16.xpose.msra.mxu0 0
    %242 = vmatprep.subr.bf16.mxu0 0
    %243 = vmatpush1.bf16.xpose.msra.mxu0 0
    %244 = vmatprep.subr.bf16.mxu0 0
    %245 = vmatpush1.bf16.xpose.msra.mxu0 0
    %246 = vmatprep.subr.bf16.mxu0 0
    %247 = vmatpush1.bf16.xpose.msra.mxu0 0
    %248 = vmatprep.subr.bf16.mxu0 0
    %249 = vmatpush1.bf16.xpose.msra.mxu0 0
    %250 = vmatprep.mubr.bf16.mxu0 0
    %251 = vmatmul.mubr.bf16.gmra.mrb[0].mxu0 %v213
    %v252 = vpop.f32.mrb[0].mxu0
    %v253 = vadd.f32 %v211, %v252
    %v254 = vpop.f32.mrb[0].mxu0
    %v255 = vpop.f32.mrb[0].mxu0
    %v256 = vpop.f32.mrb[0].mxu0
    %257 = vdwg.mxu0
    %v258 = vsub.f32 0.0, %v253
    %v259 = vmul.f32 %v258, 1.442695
    %v260 = vpow.pop %v259
    %v261 = vadd.f32 %v260, 1.0
    %v262 = vrcp.pop %v261
    %vm263 = vcmask 57344
    %264 = vst.msk [vmem:[#allocation9] sm:$0x1] %vm263, %v262
    // Predicated region
    $region42: #{tpu_custom_call.1} parent=1 // pred_check
      _
    $region43: #{tpu_custom_call.1} parent=1 // pred_check_branch
      %266 = sbr.rel (0) target = $region45
    $region44: #{tpu_custom_call.1} parent=1 // pred_region
      %s268 = ssub.s32 16, 16
      %269 = vsyncadd [#allocation5], %s268
      %s271 = sshll.u32 [#allocation9], 4
      %s272 = int_to_ptr.vmem [resolvable:$true] %s271
      %274 = dma.vmem_to_hbm [thread:$0]  %s272, 16, %s7, [#allocation5]
    $region45: #{tpu_custom_call.1} parent=1 // pred_fallthru
      _
    // Predicated region
    $region46: #{tpu_custom_call.1} parent=1 // pred_check
      _
    $region47: #{tpu_custom_call.1} parent=1 // pred_check_branch
      %276 = sbr.rel (0) target = $region49
    $region48: #{tpu_custom_call.1} parent=1 // pred_region
      %277 = dma.done [#allocation5], 16
    $region49: #{tpu_custom_call.1} parent=1 // pred_fallthru
      _
    %278 = vsyncpa [#allocation4], 1
    %279 = vsyncpa [#allocation7], 1
    %280 = vsyncpa [#allocation5], 1

</llo_original>
